<compile_context>
chip_gen: v6e
topology: v6e:2x2x1
jax: 0.10.0
libtpu: 0.0.40
codegen_flags: <defaults>
</compile_context>

<pallas_src>
import functools
import math

import jax
import jax.numpy as jnp
from jax.experimental import pallas as pl
from jax.experimental.pallas import tpu as pltpu


# ---------------------------------------------------------------------------
# Stage 1: hyper-network + per-sample mixing (tiny, one kernel invocation).
# ---------------------------------------------------------------------------
def _hyper_mix_kernel(actions_ref, states_ref, w_ref, b_ref,
                      mixed_ref, hb_ref, *, n_agents, action_dim):
    states = states_ref[...]                                    # (B, S) f32
    # One fused MXU matmul for hyper_w and hyper_b (single push/drain).
    hyper = jnp.dot(states, w_ref[...],
                    preferred_element_type=jnp.float32) + b_ref[...]  # (B, NA*AD+AD)
    na_ad = n_agents * action_dim
    w_abs = jnp.abs(hyper[:, :na_ad])                           # (B, NA*AD)
    hb_ref[...] = hyper[:, na_ad:na_ad + action_dim]            # (B, AD)

    # torch.bmm(actions.view(B,1,NA), w.view(B,NA,AD)).squeeze(1)
    actions = actions_ref[...]                                  # (B, NA)
    mixed = actions[:, 0:1] * w_abs[:, 0:action_dim]
    for a in range(1, n_agents):
        mixed = mixed + actions[:, a:a + 1] * w_abs[:, a * action_dim:(a + 1) * action_dim]
    mixed_ref[...] = mixed                                      # (B, AD)


# ---------------------------------------------------------------------------
# Stage 2: lane-dense broadcast-add over the (B_pad, B_pad*AD) output slab.
#   mixed_ref : (1,  tj*AD)   mixed actions for this j tile (sublane bcast)
#   hb_ref    : (ti, LANE)    hyper_b rows for this i tile, 1-vreg lane-rep
#   out_ref   : (ti, tj*AD)
# The hb lane replication to the full tile width is done implicitly by adding
# the same (ti, LANE) block to each static LANE-wide chunk (VPU work that
# hides under the saturated store slot; no HBM-side replication).
# ---------------------------------------------------------------------------
def _bcast_add_kernel(mixed_ref, hb_ref, out_ref, *, rep, lane):
    hb = hb_ref[...]                                            # (ti, LANE)
    for r in range(rep):                                        # static unroll
        sl = slice(r * lane, (r + 1) * lane)
        out_ref[:, sl] = hb + mixed_ref[:, sl]


def _round_up(x, m):
    return ((x + m - 1) // m) * m


def _pick_tile(total, limit, quantum):
    """Largest multiple of `quantum` that divides `total` and is <= limit.
    `total` is guaranteed (by padding) to be a multiple of `quantum`."""
    best = quantum
    cand = quantum
    upper = min(limit, total)
    while cand <= upper:
        if total % cand == 0:
            best = cand
        cand += quantum
    return best


def prepare_params(Ww, bw, Wb, bb):
    """One-time parameter prep: fuse hyper_w/hyper_b and pre-transpose."""
    w_fused = jnp.concatenate([Ww, Wb], axis=0).T.astype(jnp.float32)   # (S, NA*AD+AD)
    b_fused = jnp.concatenate([bw, bb], axis=0).reshape(1, -1).astype(jnp.float32)
    return w_fused, b_fused


def qmix_forward(actions, states, w_fused, b_fused, *, n_agents, action_dim):
    """Pallas implementation of QMixNet.forward (returns (B, B, AD) like torch)."""
    B = actions.shape[0]
    ad = action_dim
    vspec = pl.BlockSpec(memory_space=pltpu.MemorySpace.VMEM)

    # ---- Stage 1: (B, AD) mixed actions + hyper_b output (tiny). ----
    mixed, hb = pl.pallas_call(
        functools.partial(_hyper_mix_kernel, n_agents=n_agents, action_dim=ad),
        out_shape=(jax.ShapeDtypeStruct((B, ad), jnp.float32),
                   jax.ShapeDtypeStruct((B, ad), jnp.float32)),
        in_specs=[vspec] * 4,
        out_specs=(vspec, vspec),
    )(actions.astype(jnp.float32), states.astype(jnp.float32), w_fused, b_fused)

    # ---- Tiling geometry (lane-aligned, ragged-B safe via padding). ----
    lane = ad * 128 // math.gcd(ad, 128)        # lcm(ad, 128): minimal lane-aligned hb width
    lane_quantum = lane // ad                   # tj quantum so tj*ad % 128 == 0
    q = 8 * lane_quantum // math.gcd(8, lane_quantum)   # lcm(8, lane_quantum)
    B_pad = _round_up(B, q)

    # Lane-dense / one-vreg-replicated operands (tiny vs. the output slab).
    mixed_flat = mixed.reshape(1, B * ad)                        # (1, B*AD)
    hb128 = jnp.tile(hb, (1, lane // ad))                        # (B, LANE)
    if B_pad != B:
        mixed_flat = jnp.pad(mixed_flat, ((0, 0), (0, (B_pad - B) * ad)))
        hb128 = jnp.pad(hb128, ((0, B_pad - B), (0, 0)))

    # Joint tile selection from a VMEM byte budget: output block <= ~4 MiB
    # (safe for v7x's 64 MiB VMEM with double buffering), >= 2 blocks on the
    # i (row) axis so both v7x TensorCores get work.
    TARGET_BLOCK_BYTES = 4 * 1024 * 1024
    tj = _pick_tile(B_pad, max(lane_quantum, 4096 // ad), lane_quantum)
    tj_ad = tj * ad
    ti_limit = max(8, min(TARGET_BLOCK_BYTES // (4 * tj_ad), B_pad // 2))
    ti = _pick_tile(B_pad, ti_limit, 8)
    rep = tj_ad // lane

    grid = (B_pad // ti, B_pad // tj)                            # j innermost
    cost = pl.CostEstimate(
        flops=B_pad * B_pad * ad,
        transcendentals=0,
        bytes_accessed=4 * (B_pad * B_pad * ad            # output writes
                            + B_pad * lane                # hb block per i
                            + grid[0] * B_pad * ad),      # mixed blocks
    )

    out2d = pl.pallas_call(
        functools.partial(_bcast_add_kernel, rep=rep, lane=lane),
        out_shape=jax.ShapeDtypeStruct((B_pad, B_pad * ad), jnp.float32),
        grid_spec=pltpu.PrefetchScalarGridSpec(
            num_scalar_prefetch=0,
            grid=grid,
            in_specs=[
                pl.BlockSpec((1, tj_ad), lambda i, j: (0, j)),    # mixed (lane-dense)
                pl.BlockSpec((ti, lane), lambda i, j: (i, 0)),    # hb (reused across j)
            ],
            out_specs=pl.BlockSpec((ti, tj_ad), lambda i, j: (i, j)),
        ),
        compiler_params=pltpu.CompilerParams(
            # i megacore-sharded on v7x; j sequential so the hb block DMA is
            # skipped across the inner loop.  Neutral on v5e/v6e.
            dimension_semantics=("parallel", "arbitrary"),
            vmem_limit_bytes=40 * 1024 * 1024,
        ),
        cost_estimate=cost,
    )(mixed_flat, hb128)

    if B_pad != B:
        out2d = out2d[:B, :B * ad]
    # PyTorch's (B, AD) + (B, 1, AD) broadcast -> (B, B, AD).  Free reshape.
    return out2d.reshape(B, B, ad)


# ---------------------------------------------------------------------------
# Pure-JAX reference (transcription of the PyTorch forward) + init.
# ---------------------------------------------------------------------------
def qmix_reference(actions, states, params, *, n_agents, action_dim):
    Ww, bw, Wb, bb = params
    B = actions.shape[0]
    w = jnp.abs(states @ Ww.T + bw).reshape(B, n_agents, action_dim)
    b = (states @ Wb.T + bb).reshape(B, 1, action_dim)
    mixed = jnp.matmul(actions.reshape(B, 1, n_agents), w)[:, 0, :]   # (B, AD)
    return mixed + b                                                  # (B, B, AD)


def init_params(key, state_dim, n_agents, action_dim):
    k1, k2, k3, k4 = jax.random.split(key, 4)
    lim = 1.0 / jnp.sqrt(jnp.float32(state_dim))
    Ww = jax.random.uniform(k1, (n_agents * action_dim, state_dim), jnp.float32, -lim, lim)
    bw = jax.random.uniform(k2, (n_agents * action_dim,), jnp.float32, -lim, lim)
    Wb = jax.random.uniform(k3, (action_dim, state_dim), jnp.float32, -lim, lim)
    bb = jax.random.uniform(k4, (action_dim,), jnp.float32, -lim, lim)
    return Ww, bw, Wb, bb


if __name__ == "__main__":
    state_dim, n_agents, action_dim = 32, 4, 8

    key = jax.random.PRNGKey(0)
    kp, kd = jax.random.split(key)
    params = init_params(kp, state_dim, n_agents, action_dim)
    w_fused, b_fused = prepare_params(*params)

    fwd = jax.jit(functools.partial(qmix_forward,
                                    n_agents=n_agents, action_dim=action_dim))

    # batch=2   : small primary check (padding + single-column grid)
    # batch=50  : ragged batch -> exercises the pad/slice safety path
    # batch=640 : multi-tile check (2x2 grid, hb-reuse + megacore path)
    for batch in (2, 50, 640):
        ka, ks = jax.random.split(jax.random.fold_in(kd, batch))
        actions = jax.random.normal(ka, (batch, n_agents), jnp.float32)
        states = jax.random.normal(ks, (batch, state_dim), jnp.float32)

        out = jax.block_until_ready(fwd(actions, states, w_fused, b_fused))
        ref = qmix_reference(actions, states, params,
                             n_agents=n_agents, action_dim=action_dim)

        assert out.shape == (batch, batch, action_dim), out.shape
        assert jnp.allclose(out, ref, atol=1e-4, rtol=1e-5), (
            f"batch={batch} max abs err = {jnp.max(jnp.abs(out - ref))}")

    print("KERNEL_OK")
</pallas_src>

<mosaic_0001>
module attributes {stable_mosaic.version = 11 : i64} {
  func.func @_hyper_mix_kernel(%arg0: memref<2x4xf32, #tpu.memory_space<vmem>>, %arg1: memref<2x32xf32, #tpu.memory_space<vmem>>, %arg2: memref<32x40xf32, #tpu.memory_space<vmem>>, %arg3: memref<1x40xf32, #tpu.memory_space<vmem>>, %arg4: memref<2x8xf32, #tpu.memory_space<vmem>>, %arg5: memref<2x8xf32, #tpu.memory_space<vmem>>) attributes {dimension_semantics = [], scalar_prefetch = 0 : i64, scratch_operands = 0 : i64, tpu.core_type = #tpu.core_type<tc>} {
    %c0 = arith.constant 0 : index
    %c0_0 = arith.constant 0 : index
    %0 = vector.load %arg1[%c0, %c0_0] : memref<2x32xf32, #tpu.memory_space<vmem>>, vector<2x32xf32>
    %c0_1 = arith.constant 0 : index
    %c0_2 = arith.constant 0 : index
    %1 = vector.load %arg2[%c0_1, %c0_2] : memref<32x40xf32, #tpu.memory_space<vmem>>, vector<32x40xf32>
    %cst = arith.constant dense<0.000000e+00> : vector<2x40xf32>
    %2 = tpu.matmul %0, %1, %cst {dimension_numbers = #tpu.dot_dimension_numbers<[1], [0], [0], [1], [0, 0, 1, 1], [], []>} : vector<2x32xf32>, vector<32x40xf32>, vector<2x40xf32> -> vector<2x40xf32>
    %c0_3 = arith.constant 0 : index
    %c0_4 = arith.constant 0 : index
    %3 = vector.load %arg3[%c0_3, %c0_4] : memref<1x40xf32, #tpu.memory_space<vmem>>, vector<1x40xf32>
    %4 = vector.broadcast %3 : vector<1x40xf32> to vector<2x40xf32>
    %5 = arith.addf %2, %4 : vector<2x40xf32>
    %6 = vector.extract_strided_slice %5 {offsets = [0, 0], sizes = [2, 32], strides = [1, 1]} : vector<2x40xf32> to vector<2x32xf32>
    %7 = math.absf %6 : vector<2x32xf32>
    %8 = vector.extract_strided_slice %5 {offsets = [0, 32], sizes = [2, 8], strides = [1, 1]} : vector<2x40xf32> to vector<2x8xf32>
    %c0_5 = arith.constant 0 : index
    %c0_6 = arith.constant 0 : index
    %9 = vector.load %arg5[%c0_5, %c0_6] : memref<2x8xf32, #tpu.memory_space<vmem>>, vector<2x8xf32>
    tpu.vector_store %arg5[%c0_5, %c0_6], %8 {strides = array<i32>} : memref<2x8xf32, #tpu.memory_space<vmem>>, vector<2x8xf32>,
    %c0_7 = arith.constant 0 : index
    %c0_8 = arith.constant 0 : index
    %10 = vector.load %arg0[%c0_7, %c0_8] : memref<2x4xf32, #tpu.memory_space<vmem>>, vector<2x4xf32>
    %11 = vector.extract_strided_slice %10 {offsets = [0, 0], sizes = [2, 1], strides = [1, 1]} : vector<2x4xf32> to vector<2x1xf32>
    %12 = vector.extract_strided_slice %7 {offsets = [0, 0], sizes = [2, 8], strides = [1, 1]} : vector<2x32xf32> to vector<2x8xf32>
    %13 = vector.broadcast %11 : vector<2x1xf32> to vector<2x8xf32>
    %14 = arith.mulf %13, %12 : vector<2x8xf32>
    %15 = vector.extract_strided_slice %10 {offsets = [0, 1], sizes = [2, 1], strides = [1, 1]} : vector<2x4xf32> to vector<2x1xf32>
    %16 = vector.extract_strided_slice %7 {offsets = [0, 8], sizes = [2, 8], strides = [1, 1]} : vector<2x32xf32> to vector<2x8xf32>
    %17 = vector.broadcast %15 : vector<2x1xf32> to vector<2x8xf32>
    %18 = arith.mulf %17, %16 : vector<2x8xf32>
    %19 = arith.addf %14, %18 : vector<2x8xf32>
    %20 = vector.extract_strided_slice %10 {offsets = [0, 2], sizes = [2, 1], strides = [1, 1]} : vector<2x4xf32> to vector<2x1xf32>
    %21 = vector.extract_strided_slice %7 {offsets = [0, 16], sizes = [2, 8], strides = [1, 1]} : vector<2x32xf32> to vector<2x8xf32>
    %22 = vector.broadcast %20 : vector<2x1xf32> to vector<2x8xf32>
    %23 = arith.mulf %22, %21 : vector<2x8xf32>
    %24 = arith.addf %19, %23 : vector<2x8xf32>
    %25 = vector.extract_strided_slice %10 {offsets = [0, 3], sizes = [2, 1], strides = [1, 1]} : vector<2x4xf32> to vector<2x1xf32>
    %26 = vector.extract_strided_slice %7 {offsets = [0, 24], sizes = [2, 8], strides = [1, 1]} : vector<2x32xf32> to vector<2x8xf32>
    %27 = vector.broadcast %25 : vector<2x1xf32> to vector<2x8xf32>
    %28 = arith.mulf %27, %26 : vector<2x8xf32>
    %29 = arith.addf %24, %28 : vector<2x8xf32>
    %c0_9 = arith.constant 0 : index
    %c0_10 = arith.constant 0 : index
    %30 = vector.load %arg4[%c0_9, %c0_10] : memref<2x8xf32, #tpu.memory_space<vmem>>, vector<2x8xf32>
    tpu.vector_store %arg4[%c0_9, %c0_10], %29 {strides = array<i32>} : memref<2x8xf32, #tpu.memory_space<vmem>>, vector<2x8xf32>,
    return
  }
}

module attributes {stable_mosaic.version = 11 : i64} {
  func.func @_bcast_add_kernel(%arg0: i32, %arg1: i32, %arg2: memref<1x128xf32, #tpu.memory_space<vmem>>, %arg3: memref<8x128xf32, #tpu.memory_space<vmem>>, %arg4: memref<8x128xf32, #tpu.memory_space<vmem>>) attributes {dimension_semantics = [#tpu.dimension_semantics<parallel>, #tpu.dimension_semantics<arbitrary>], iteration_bounds = array<i64: 2, 1>, scalar_prefetch = 0 : i64, scratch_operands = 0 : i64, tpu.core_type = #tpu.core_type<tc>, window_params = [{transform_indices = @transform_0, window_bounds = array<i64: 1, 128>}, {transform_indices = @transform_1, window_bounds = array<i64: 8, 128>}, {transform_indices = @transform_2, window_bounds = array<i64: 8, 128>}]} {
    %c0 = arith.constant 0 : index
    %c0_0 = arith.constant 0 : index
    %0 = vector.load %arg3[%c0, %c0_0] : memref<8x128xf32, #tpu.memory_space<vmem>>, vector<8x128xf32>
    %c0_1 = arith.constant 0 : index
    %c0_2 = arith.constant 0 : index
    %1 = vector.load %arg2[%c0_1, %c0_2] : memref<1x128xf32, #tpu.memory_space<vmem>>, vector<1x128xf32>
    %2 = vector.broadcast %1 : vector<1x128xf32> to vector<8x128xf32>
    %3 = arith.addf %0, %2 : vector<8x128xf32>
    %c0_3 = arith.constant 0 : index
    %c0_4 = arith.constant 0 : index
    %4 = vector.load %arg4[%c0_3, %c0_4] : memref<8x128xf32, #tpu.memory_space<vmem>>, vector<8x128xf32>
    tpu.vector_store %arg4[%c0_3, %c0_4], %3 {strides = array<i32>} : memref<8x128xf32, #tpu.memory_space<vmem>>, vector<8x128xf32>,
    return
  }
  func.func @transform_0(%arg0: i32, %arg1: i32) -> (i32, i32) {
    %c0_i32 = arith.constant 0 : i32
    %c0_i32_0 = arith.constant 0 : i32
    return %c0_i32, %arg1 : i32, i32
  }
  func.func @transform_1(%arg0: i32, %arg1: i32) -> (i32, i32) {
    %c0_i32 = arith.constant 0 : i32
    %c0_i32_0 = arith.constant 0 : i32
    return %arg0, %c0_i32 : i32, i32
  }
  func.func @transform_2(%arg0: i32, %arg1: i32) -> (i32, i32) {
    %c0_i32 = arith.constant 0 : i32
    return %arg0, %arg1 : i32, i32
  }
}

</mosaic_0001>

<llo_original>
// kernel: tile.9
$region0: #{tile.9}
  %s0 = inlined_call_operand.vmem [shape: f32[2,16,8], index: 0, kind: input, shape index: {}]
  %s1 = inlined_call_operand.vmem [shape: f32[2,128], index: 1, kind: output, shape index: {}]
  $region1: #{tile.9} parent=0
    #allocation0 [shape = 'u8[4096]{0}', space=vmem, size = 0x1000, scoped, tag = 'scoped mem for output reshape']
    %s2 = smov 3
    %v3 = vld [vmem:[%s0] ss:$16 sm:%s2]
    %vm4 = vcmask 64512
    %5 = vst.msk [vmem:[#allocation0] sm:$0x3] %vm4, %v3
    %s6 = scalar_lea.vmem %s0, 15
    %s7 = smov 3
    %v8 = vld [vmem:[%s6] ss:$16 sm:%s7]
    %9 = vrot.lane.b32.xlu0 %v8, 120
    %v10 = vpop.permute.xlu0 %9
    %vm11 = vcmask 1048512
    %12 = vst.msk [vmem:[#allocation0] sm:$0x3] %vm11, %v10
    %s13 = scalar_lea.vmem %s0, 14
    %s14 = smov 3
    %v15 = vld [vmem:[%s13] ss:$16 sm:%s14]
    %16 = vrot.lane.b32.xlu0 %v15, 112
    %v17 = vpop.permute.xlu0 %16
    %vm18 = vcmask 982912
    %19 = vst.msk [vmem:[#allocation0] sm:$0x3] %vm18, %v17
    %s20 = scalar_lea.vmem %s0, 13
    %s21 = smov 3
    %v22 = vld [vmem:[%s20] ss:$16 sm:%s21]
    %23 = vrot.lane.b32.xlu0 %v22, 104
    %v24 = vpop.permute.xlu0 %23
    %vm25 = vcmask 917312
    %26 = vst.msk [vmem:[#allocation0] sm:$0x3] %vm25, %v24
    %s27 = scalar_lea.vmem %s0, 12
    %s28 = smov 3
    %v29 = vld [vmem:[%s27] ss:$16 sm:%s28]
    %30 = vrot.lane.b32.xlu0 %v29, 96
    %v31 = vpop.permute.xlu0 %30
    %vm32 = vcmask 851712
    %33 = vst.msk [vmem:[#allocation0] sm:$0x3] %vm32, %v31
    %s34 = scalar_lea.vmem %s0, 11
    %s35 = smov 3
    %v36 = vld [vmem:[%s34] ss:$16 sm:%s35]
    %37 = vrot.lane.b32.xlu0 %v36, 88
    %v38 = vpop.permute.xlu0 %37
    %vm39 = vcmask 786112
    %40 = vst.msk [vmem:[#allocation0] sm:$0x3] %vm39, %v38
    %s41 = scalar_lea.vmem %s0, 10
    %s42 = smov 3
    %v43 = vld [vmem:[%s41] ss:$16 sm:%s42]
    %44 = vrot.lane.b32.xlu0 %v43, 80
    %v45 = vpop.permute.xlu0 %44
    %vm46 = vcmask 720512
    %47 = vst.msk [vmem:[#allocation0] sm:$0x3] %vm46, %v45
    %s48 = scalar_lea.vmem %s0, 9
    %s49 = smov 3
    %v50 = vld [vmem:[%s48] ss:$16 sm:%s49]
    %51 = vrot.lane.b32.xlu0 %v50, 72
    %v52 = vpop.permute.xlu0 %51
    %vm53 = vcmask 654912
    %54 = vst.msk [vmem:[#allocation0] sm:$0x3] %vm53, %v52
    %s55 = scalar_lea.vmem %s0, 8
    %s56 = smov 3
    %v57 = vld [vmem:[%s55] ss:$16 sm:%s56]
    %58 = vrot.lane.b32.xlu0 %v57, 64
    %v59 = vpop.permute.xlu0 %58
    %vm60 = vcmask 589312
    %61 = vst.msk [vmem:[#allocation0] sm:$0x3] %vm60, %v59
    %s62 = scalar_lea.vmem %s0, 7
    %s63 = smov 3
    %v64 = vld [vmem:[%s62] ss:$16 sm:%s63]
    %65 = vrot.lane.b32.xlu0 %v64, 56
    %v66 = vpop.permute.xlu0 %65
    %vm67 = vcmask 523712
    %68 = vst.msk [vmem:[#allocation0] sm:$0x3] %vm67, %v66
    %s69 = scalar_lea.vmem %s0, 6
    %s70 = smov 3
    %v71 = vld [vmem:[%s69] ss:$16 sm:%s70]
    %72 = vrot.lane.b32.xlu0 %v71, 48
    %v73 = vpop.permute.xlu0 %72
    %vm74 = vcmask 458112
    %75 = vst.msk [vmem:[#allocation0] sm:$0x3] %vm74, %v73
    %s76 = scalar_lea.vmem %s0, 5
    %s77 = smov 3
    %v78 = vld [vmem:[%s76] ss:$16 sm:%s77]
    %79 = vrot.lane.b32.xlu0 %v78, 40
    %v80 = vpop.permute.xlu0 %79
    %vm81 = vcmask 392512
    %82 = vst.msk [vmem:[#allocation0] sm:$0x3] %vm81, %v80
    %s83 = scalar_lea.vmem %s0, 4
    %s84 = smov 3
    %v85 = vld [vmem:[%s83] ss:$16 sm:%s84]
    %86 = vrot.lane.b32.xlu0 %v85, 32
    %v87 = vpop.permute.xlu0 %86
    %vm88 = vcmask 326912
    %89 = vst.msk [vmem:[#allocation0] sm:$0x3] %vm88, %v87
    %s90 = scalar_lea.vmem %s0, 3
    %s91 = smov 3
    %v92 = vld [vmem:[%s90] ss:$16 sm:%s91]
    %93 = vrot.lane.b32.xlu0 %v92, 24
    %v94 = vpop.permute.xlu0 %93
    %vm95 = vcmask 261312
    %96 = vst.msk [vmem:[#allocation0] sm:$0x3] %vm95, %v94
    %s97 = scalar_lea.vmem %s0, 2
    %s98 = smov 3
    %v99 = vld [vmem:[%s97] ss:$16 sm:%s98]
    %100 = vrot.lane.b32.xlu0 %v99, 16
    %v101 = vpop.permute.xlu0 %100
    %vm102 = vcmask 195712
    %103 = vst.msk [vmem:[#allocation0] sm:$0x3] %vm102, %v101
    %s104 = scalar_lea.vmem %s0, 1
    %s105 = smov 3
    %v106 = vld [vmem:[%s104] ss:$16 sm:%s105]
    %107 = vrot.lane.b32.xlu0 %v106, 8
    %v108 = vpop.permute.xlu0 %107
    %vm109 = vcmask 130112
    %110 = vst.msk [vmem:[#allocation0] sm:$0x3] %vm109, %v108
    %s112 = sshll.u32 1, 2
    %s113 = ssub.s32 %s112, 1
    %v115 = vld [vmem:[#allocation0] sm:%s113]
    %s116 = sshll.u32 1, 2
    %s117 = ssub.s32 %s116, 1
    %118 = vst [vmem:[%s1] sm:%s117] %v115

// kernel: qmix_forward.2
$region0: #{qmix_forward.2}
  #allocation0 [shape = 'u32[]', space=smem, size = 0x4, offset = 0x4, fixed_abs, tag = 'smem constant byte address 0x4 - core index']
  #allocation1 [shape = 'u32[144,128]{1,0:T(1,128)}', space=vmem, size = 0x12000, scoped, tag = 'internal scratch']
  %s0 = inlined_call_operand.hbm [shape: f32[2,4], index: 0, kind: input, shape index: {}]
  %s1 = inlined_call_operand.hbm [shape: f32[2,32], index: 1, kind: input, shape index: {}]
  %s2 = inlined_call_operand.hbm [shape: f32[32,40], index: 2, kind: input, shape index: {}]
  %s3 = inlined_call_operand.vmem [shape: f32[1,40], index: 3, kind: input, shape index: {}]
  %s4 = inlined_call_operand.vmem [shape: f32[2,8], index: 4, kind: output, shape index: {0}]
  %s5 = inlined_call_operand.vmem [shape: f32[2,8], index: 5, kind: output, shape index: {1}]
  %6 = xla_tuple %s4, %s5
  %s7 = sld [smem:[#allocation0]]
  $region46: #{qmix_forward.2} parent=0
    _
  %s9 = ssub.s32 1, %s7
  %s10 = scalar_select 0, %s9, %s7
  $region1: #{qmix_forward.2} parent=0
    #allocation2 [shape = 'u8[1024]{0}', space=vmem, size = 0x400, scoped, tag = 'input window, operand 0, single buffered']
    #allocation3 [shape = 's32[1]{0}', space=sflag, size = 0x4, scoped, tag = 'scoped memory for qmix_forward.2']
    #allocation4 [shape = 'u8[1024]{0}', space=vmem, size = 0x400, scoped, tag = 'input window, operand 1, single buffered']
    #allocation5 [shape = 's32[1]{0}', space=sflag, size = 0x4, scoped, tag = 'scoped memory for qmix_forward.2']
    #allocation6 [shape = 'u8[16384]{0}', space=vmem, size = 0x4000, scoped, tag = 'input window, operand 2, single buffered']
    %11 = vsyncpa [#allocation3], 0
    %12 = vsyncpa [#allocation5], 0
    // Predicated region
    $region2: #{qmix_forward.2} parent=1 // pred_check
      _
    $region3: #{qmix_forward.2} parent=1 // pred_check_branch
      %14 = sbr.rel (0) target = $region5
    $region4: #{qmix_forward.2} parent=1 // pred_region
      %s16 = ssub.s32 32, 32
      %17 = vsyncadd [#allocation3], %s16
      %s19 = sshll.u32 [#allocation2], 4
      %s20 = int_to_ptr.vmem [resolvable:$true] %s19
      %22 = dma.hbm_to_vmem [thread:$0]  %s0, 32, %s20, [#allocation3]
    $region5: #{qmix_forward.2} parent=1 // pred_fallthru
      _
    // Predicated region
    $region6: #{qmix_forward.2} parent=1 // pred_check
      _
    $region7: #{qmix_forward.2} parent=1 // pred_check_branch
      %24 = sbr.rel (0) target = $region9
    $region8: #{qmix_forward.2} parent=1 // pred_region
      %s26 = ssub.s32 32, 32
      %27 = vsyncadd [#allocation5], %s26
      %s29 = sshll.u32 [#allocation4], 4
      %s30 = int_to_ptr.vmem [resolvable:$true] %s29
      %32 = dma.hbm_to_vmem [thread:$0]  %s1, 32, %s30, [#allocation5]
    $region9: #{qmix_forward.2} parent=1 // pred_fallthru
      _
    // Predicated region
    $region10: #{qmix_forward.2} parent=1 // pred_check
      _
    $region11: #{qmix_forward.2} parent=1 // pred_check_branch
      %34 = sbr.rel (0) target = $region13
    $region12: #{qmix_forward.2} parent=1 // pred_region
      %s36 = ssub.s32 512, 512
      %37 = vsyncadd [#allocation5], %s36
      %s38 = sshll.u32 [#allocation6], 4
      %s39 = int_to_ptr.vmem [resolvable:$true] %s38
      %44 = dma.hbm_to_vmem [thread:$0]  %s2, 512, %s39, [#allocation5], 128, 128, 8
    $region13: #{qmix_forward.2} parent=1 // pred_fallthru
      _
    // Predicated region
    $region14: #{qmix_forward.2} parent=1 // pred_check
      _
    $region15: #{qmix_forward.2} parent=1 // pred_check_branch
      %46 = sbr.rel (0) target = $region17
    $region16: #{qmix_forward.2} parent=1 // pred_region
      _
    $region17: #{qmix_forward.2} parent=1 // pred_fallthru
      _
    // Predicated region
    $region18: #{qmix_forward.2} parent=1 // pred_check
      _
    $region19: #{qmix_forward.2} parent=1 // pred_check_branch
      %48 = sbr.rel (0) target = $region21
    $region20: #{qmix_forward.2} parent=1 // pred_region
      %49 = dma.done [#allocation3], 32
    $region21: #{qmix_forward.2} parent=1 // pred_fallthru
      _
    // Predicated region
    $region22: #{qmix_forward.2} parent=1 // pred_check
      _
    $region23: #{qmix_forward.2} parent=1 // pred_check_branch
      %51 = sbr.rel (0) target = $region25
    $region24: #{qmix_forward.2} parent=1 // pred_region
      %52 = dma.done [#allocation5], 32
    $region25: #{qmix_forward.2} parent=1 // pred_fallthru
      _
    // Predicated region
    $region26: #{qmix_forward.2} parent=1 // pred_check
      _
    $region27: #{qmix_forward.2} parent=1 // pred_check_branch
      %54 = sbr.rel (0) target = $region29
    $region28: #{qmix_forward.2} parent=1 // pred_region
      %55 = dma.done [#allocation5], 512
    $region29: #{qmix_forward.2} parent=1 // pred_fallthru
      _
    %v56 = vld [vmem:[#allocation4] sm:$0x3]
    %v57 = vld [vmem:[#allocation6] sm:$0xff]
    %v58 = vld [vmem:[#allocation6 + $0x8] sm:$0xff]
    %v59 = vld [vmem:[#allocation6 + $0x10] sm:$0xff]
    %v60 = vld [vmem:[#allocation6 + $0x18] sm:$0xff]
    %v61 = vld [vmem:[%s3] sm:$0x1]
    %v63 = vlaneseq
    %v64 = vshrl.u32 %v63, 7
    %v65 = vsub.s32 0, %v64
    %v66 = vrot.slane %v61, %v65
    %vm68 = vcmask 261120
    %v70 = vsel %vm68, %v56, 0
    %72 = vmatprep.subr.mxu0 0.0
    %73 = vmatpush1.msra.mxu0 0.0
    %74 = vmatprep.subr.mxu0 0.0
    %75 = vmatpush1.msra.mxu0 0.0
    %76 = vmatprep.subr.mxu0 0.0
    %77 = vmatpush1.msra.mxu0 0.0
    %78 = vmatprep.subr.mxu0 0.0
    %79 = vmatpush1.msra.mxu0 0.0
    %80 = vmatprep.subr.mxu0 0.0
    %81 = vmatpush1.msra.mxu0 0.0
    %82 = vmatprep.subr.mxu0 0.0
    %83 = vmatpush1.msra.mxu0 0.0
    %84 = vmatprep.subr.mxu0 0.0
    %85 = vmatpush1.msra.mxu0 0.0
    %86 = vmatprep.subr.mxu0 0.0
    %87 = vmatpush1.msra.mxu0 0.0
    %88 = vmatprep.subr.mxu0 0.0
    %89 = vmatpush1.msra.mxu0 0.0
    %90 = vmatprep.subr.mxu0 0.0
    %91 = vmatpush1.msra.mxu0 0.0
    %92 = vmatprep.subr.mxu0 0.0
    %93 = vmatpush1.msra.mxu0 0.0
    %94 = vmatprep.subr.mxu0 0.0
    %95 = vmatpush1.msra.mxu0 0.0
    %96 = vmatprep.subr.mxu0 0.0
    %97 = vmatpush1.msra.mxu0 %v60
    %98 = vmatprep.subr.mxu0 0.0
    %99 = vmatpush1.msra.mxu0 %v59
    %100 = vmatprep.subr.mxu0 0.0
    %101 = vmatpush1.msra.mxu0 %v58
    %102 = vmatprep.subr.mxu0 0.0
    %103 = vmatpush1.msra.mxu0 %v57
    %104 = vmatprep.subr.mxu0 0.0
    %105 = vmatpush2.msra.mxu0 0.0
    %106 = vmatprep.subr.mxu0 0.0
    %107 = vmatpush2.msra.mxu0 0.0
    %108 = vmatprep.subr.mxu0 0.0
    %109 = vmatpush2.msra.mxu0 0.0
    %110 = vmatprep.subr.mxu0 0.0
    %111 = vmatpush2.msra.mxu0 0.0
    %112 = vmatprep.subr.mxu0 0.0
    %113 = vmatpush2.msra.mxu0 0.0
    %114 = vmatprep.subr.mxu0 0.0
    %115 = vmatpush2.msra.mxu0 0.0
    %116 = vmatprep.subr.mxu0 0.0
    %117 = vmatpush2.msra.mxu0 0.0
    %118 = vmatprep.subr.mxu0 0.0
    %119 = vmatpush2.msra.mxu0 0.0
    %120 = vmatprep.subr.mxu0 0.0
    %121 = vmatpush2.msra.mxu0 0.0
    %122 = vmatprep.subr.mxu0 0.0
    %123 = vmatpush2.msra.mxu0 0.0
    %124 = vmatprep.subr.mxu0 0.0
    %125 = vmatpush2.msra.mxu0 0.0
    %126 = vmatprep.subr.mxu0 0.0
    %127 = vmatpush2.msra.mxu0 0.0
    %128 = vmatprep.subr.mxu0 0.0
    %129 = vmatpush2.msra.mxu0 0.0
    %130 = vmatprep.subr.mxu0 0.0
    %131 = vmatpush2.msra.mxu0 0.0
    %132 = vmatprep.subr.mxu0 0.0
    %133 = vmatpush2.msra.mxu0 0.0
    %134 = vmatprep.subr.mxu0 0.0
    %135 = vmatpush2.msra.mxu0 0.0
    %136 = vmatprep.mubr.f32.mxu0 0.0
    %137 = vmatmul.mubr.f32.gmra.mxu0 %v70
    %v138 = vpop.f32.mrf.mxu0
    %v139 = vadd.f32 %v66, %v138
    %v140 = vpop.f32.mrf.mxu0
    %141 = vdwg.mxu0
    %v142 = vand.u32 2147483647, %v139
    %144 = vrot.lane.b32.xlu0 %v139, 96
    %v145 = vpop.permute.xlu0 %144
    %vm147 = vcmask 58368
    %148 = vst.msk [vmem:[%s5] sm:$0x3] %vm147, %v145
    %v149 = vld [vmem:[#allocation2] sm:$0x3]
    %151 = vset.pattern.permute.xlu0 0
    %152 = vperm.xlu0 %151, %v149
    %v153 = vpop.permute.xlu0 %152
    %v155 = vmul.f32 %v153, %v142
    %156 = vset.pattern.permute.xlu0 1
    %157 = vperm.xlu0 %156, %v149
    %v158 = vpop.permute.xlu0 %157
    %v160 = vmul.f32 %v158, %v142
    %162 = vrot.lane.b32.xlu0 %v160, 120
    %v163 = vpop.permute.xlu0 %162
    %v165 = vadd.f32 %v155, %v163
    %166 = vset.pattern.permute.xlu0 2
    %167 = vperm.xlu0 %166, %v149
    %v168 = vpop.permute.xlu0 %167
    %v170 = vmul.f32 %v168, %v142
    %172 = vrot.lane.b32.xlu0 %v170, 112
    %v173 = vpop.permute.xlu0 %172
    %v175 = vadd.f32 %v165, %v173
    %176 = vset.pattern.permute.xlu0 3
    %177 = vperm.xlu0 %176, %v149
    %v178 = vpop.permute.xlu0 %177
    %v180 = vmul.f32 %v178, %v142
    %182 = vrot.lane.b32.xlu0 %v180, 104
    %v183 = vpop.permute.xlu0 %182
    %v185 = vadd.f32 %v175, %v183
    %186 = vst.msk [vmem:[%s4] sm:$0x3] %vm147, %v185
    // Predicated region
    $region30: #{qmix_forward.2} parent=1 // pred_check
      _
    $region31: #{qmix_forward.2} parent=1 // pred_check_branch
      %188 = sbr.rel (0) target = $region33
    $region32: #{qmix_forward.2} parent=1 // pred_region
      _
    $region33: #{qmix_forward.2} parent=1 // pred_fallthru
      _
    // Predicated region
    $region34: #{qmix_forward.2} parent=1 // pred_check
      _
    $region35: #{qmix_forward.2} parent=1 // pred_check_branch
      %190 = sbr.rel (0) target = $region37
    $region36: #{qmix_forward.2} parent=1 // pred_region
      _
    $region37: #{qmix_forward.2} parent=1 // pred_fallthru
      _
    // Predicated region
    $region38: #{qmix_forward.2} parent=1 // pred_check
      _
    $region39: #{qmix_forward.2} parent=1 // pred_check_branch
      %192 = sbr.rel (0) target = $region41
    $region40: #{qmix_forward.2} parent=1 // pred_region
      _
    $region41: #{qmix_forward.2} parent=1 // pred_fallthru
      _
    // Predicated region
    $region42: #{qmix_forward.2} parent=1 // pred_check
      _
    $region43: #{qmix_forward.2} parent=1 // pred_check_branch
      %194 = sbr.rel (0) target = $region45
    $region44: #{qmix_forward.2} parent=1 // pred_region
      _
    $region45: #{qmix_forward.2} parent=1 // pred_fallthru
      _
    %195 = vsyncpa [#allocation3], 1
    %196 = vsyncpa [#allocation5], 1

// kernel: qmix_forward.3
$region0: #{qmix_forward.3}
  #allocation0 [shape = 'u32[]', space=smem, size = 0x4, offset = 0x4, fixed_abs, tag = 'smem constant byte address 0x4 - core index']
  #allocation1 [shape = 'u32[144,128]{1,0:T(1,128)}', space=vmem, size = 0x12000, scoped, tag = 'internal scratch']
  %s0 = inlined_call_operand.vmem [shape: f32[1,128], index: 0, kind: input, shape index: {}]
  %s1 = inlined_call_operand.vmem [shape: f32[16,128], index: 1, kind: input, shape index: {}]
  %s2 = inlined_call_operand.vmem [shape: f32[16,128], index: 2, kind: output, shape index: {}]
  %s3 = sld [smem:[#allocation0]]
  $region41: #{qmix_forward.3} parent=0
    _
  %s5 = ssub.s32 1, %s3
  %s6 = scalar_select 0, %s5, %s3
  loop: start=0, step=1, limit=4
  $region2: #{qmix_forward.3} parent=0 // loop_pre_header
    _
  $region3: #{qmix_forward.3} parent=0 // loop_header
    %s8 = sphi 0, %s12
    %p9 = scmp.ge.s32.totalorder %s8, 4
    %s15 = sphi 0, %s27
    %s16 = sphi 0, %s23
    %s17 = sphi 0, %s15
    %s18 = sphi 0, %s16
    %s19 = sphi 0, %s17
    %s20 = sphi 0, %s18
    %s30 = sphi 0, %s32
    %s33 = sphi 0, %s30
    %s34 = sphi 0, %s33
    %s50 = sphi 0, %s34
    %s56 = sphi 0, %s58
    %s59 = sphi 0, %s56
    %s60 = sphi 0, %s59
    %s76 = sphi 0, %s60
    %s84 = sphi 0, %s86
    %s87 = sphi 0, %s84
    %s88 = sphi 0, %s87
    %s104 = sphi 0, %s88
  $region4: #{qmix_forward.3} parent=0 // loop_header_branch
    %11 = sbr.rel (%p9) target = $region8
  $region5: #{qmix_forward.3} parent=0 // loop_body
    %s13 = ssub.s32 %s8, 1
    %s14 = ssub.s32 %s8, 2
    %s21 = sadd.s32 1, %s16
    %p22 = scmp.ge.s32.totalorder %s21, 1
    %s23 = scalar_select %p22, 0, %s21
    %s24 = sadd.s32 1, %s15
    %s25 = scalar_select %p22, %s24, %s15
    %p26 = scmp.ge.s32.totalorder %s25, 2
    %s27 = scalar_select %p26, 0, %s25
    %s28 = ssub.s32 %s16, %s23
    %p29 = scmp.eq.s32.totalorder %s28, 0
    %s31 = sadd.s32 %s30, 1
    %s32 = scalar_select %p29, %s30, %s31
    %p35 = pneg %p29
    %p36 = scmp.eq.s32.totalorder %s8, 1
    %p37 = por %p35, %p36
    %p38 = scmp.ne.s32.totalorder %s30, %s33
    %p39 = scmp.eq.s32.totalorder %s8, 0
    %p40 = por %p38, %p39
    %p41 = scmp.ne.s32.totalorder %s30, %s33
    %p42 = scmp.eq.s32.totalorder %s13, 1
    %p43 = por %p41, %p42
    %p44 = scmp.ne.s32.totalorder %s33, %s34
    %p45 = scmp.eq.s32.totalorder %s13, 0
    %p46 = por %p44, %p45
    %p47 = scmp.ne.s32.totalorder %s33, %s34
    %p48 = scmp.eq.s32.totalorder %s14, 1
    %p49 = por %p47, %p48
    %p51 = scmp.ne.s32.totalorder %s34, %s50
    %p52 = scmp.eq.s32.totalorder %s14, 0
    %p53 = por %p51, %p52
    %s54 = ssub.s32 %s15, %s27
    %p55 = scmp.eq.s32.totalorder %s54, 0
    %s57 = sadd.s32 %s56, 1
    %s58 = scalar_select %p55, %s56, %s57
    %p61 = pneg %p55
    %p62 = scmp.eq.s32.totalorder %s8, 1
    %p63 = por %p61, %p62
    %p64 = scmp.ne.s32.totalorder %s56, %s59
    %p65 = scmp.eq.s32.totalorder %s8, 0
    %p66 = por %p64, %p65
    %p67 = scmp.ne.s32.totalorder %s56, %s59
    %p68 = scmp.eq.s32.totalorder %s13, 1
    %p69 = por %p67, %p68
    %p70 = scmp.ne.s32.totalorder %s59, %s60
    %p71 = scmp.eq.s32.totalorder %s13, 0
    %p72 = por %p70, %p71
    %p73 = scmp.ne.s32.totalorder %s59, %s60
    %p74 = scmp.eq.s32.totalorder %s14, 1
    %p75 = por %p73, %p74
    %p77 = scmp.ne.s32.totalorder %s60, %s76
    %p78 = scmp.eq.s32.totalorder %s14, 0
    %p79 = por %p77, %p78
    %s80 = ssub.s32 %s15, %s27
    %s81 = ssub.s32 %s16, %s23
    %s82 = sor.u32 %s80, %s81
    %p83 = scmp.eq.s32.totalorder %s82, 0
    %s85 = sadd.s32 %s84, 1
    %s86 = scalar_select %p83, %s84, %s85
    %p89 = pneg %p83
    %p90 = scmp.eq.s32.totalorder %s8, 1
    %p91 = por %p89, %p90
    %p92 = scmp.ne.s32.totalorder %s84, %s87
    %p93 = scmp.eq.s32.totalorder %s8, 0
    %p94 = por %p92, %p93
    %p95 = scmp.ne.s32.totalorder %s84, %s87
    %p96 = scmp.eq.s32.totalorder %s13, 1
    %p97 = por %p95, %p96
    %p98 = scmp.ne.s32.totalorder %s87, %s88
    %p99 = scmp.eq.s32.totalorder %s13, 0
    %p100 = por %p98, %p99
    %p101 = scmp.ne.s32.totalorder %s87, %s88
    %p102 = scmp.eq.s32.totalorder %s14, 1
    %p103 = por %p101, %p102
    %p105 = scmp.ne.s32.totalorder %s88, %s104
    %p106 = scmp.eq.s32.totalorder %s14, 0
    %p107 = por %p105, %p106
    %p108 = scmp.le.s32.totalorder 1, %s8
    %p109 = scmp.lt.s32.totalorder %s8, 3
    %p110 = pnand %p108, %p109
    %p111 = pneg %p110
    // Predicated region
    $region9: #{qmix_forward.3} parent=5 // pred_check
      _
    $region10: #{qmix_forward.3} parent=5 // pred_check_branch
      %113 = sbr.rel (%p110) target = $region12
    $region11: #{qmix_forward.3} parent=5 // pred_region
      %s114 = ssub.s32 %s8, 1
      // Predicated region
      $region13: #{qmix_forward.3} parent=11 // pred_check
        %p115 = pneg %p46
      $region14: #{qmix_forward.3} parent=11 // pred_check_branch
        %117 = sbr.rel (%p115) target = $region16
      $region15: #{qmix_forward.3} parent=11 // pred_region
        %p118 = scmp.lt.s32.totalorder %s18, 0
        %s119 = scalar_select %p118, %s18, 0
        %s120 = scalar_lea.vmem %s0, %s119
      $region16: #{qmix_forward.3} parent=11 // pred_fallthru
        _
    $region12: #{qmix_forward.3} parent=5 // pred_fallthru
      _
    %p121 = scmp.lt.s32.totalorder %s8, 2
    // Predicated region
    $region17: #{qmix_forward.3} parent=5 // pred_check
      %p122 = pneg %p121
    $region18: #{qmix_forward.3} parent=5 // pred_check_branch
      %124 = sbr.rel (%p122) target = $region20
    $region19: #{qmix_forward.3} parent=5 // pred_region
      // Predicated region
      $region21: #{qmix_forward.3} parent=19 // pred_check
        %p125 = pneg %p66
      $region22: #{qmix_forward.3} parent=19 // pred_check_branch
        %127 = sbr.rel (%p125) target = $region24
      $region23: #{qmix_forward.3} parent=19 // pred_region
        %p128 = scmp.lt.s32.totalorder %s15, 1
        %s129 = scalar_select %p128, %s15, 1
        %s130 = smul.addr %s129, 8
        %s131 = scalar_lea.vmem %s1, %s130
      $region24: #{qmix_forward.3} parent=19 // pred_fallthru
        _
    $region20: #{qmix_forward.3} parent=5 // pred_fallthru
      _
    %p132 = scmp.le.s32.totalorder 1, %s8
    %p133 = scmp.lt.s32.totalorder %s8, 3
    %p134 = pnand %p132, %p133
    %p135 = pneg %p134
    // Predicated region
    $region25: #{qmix_forward.3} parent=5 // pred_check
      _
    $region26: #{qmix_forward.3} parent=5 // pred_check_branch
      %137 = sbr.rel (%p134) target = $region28
    $region27: #{qmix_forward.3} parent=5 // pred_region
      %s138 = ssub.s32 %s8, 1
      %p139 = scmp.lt.s32.totalorder %s18, 0
      %s140 = scalar_select %p139, %s18, 0
      %s141 = scalar_lea.vmem %s0, %s140
      %p142 = pneg %p46
      %p143 = pneg %p43
      %p144 = scmp.lt.s32.totalorder %s17, 1
      %s145 = scalar_select %p144, %s17, 1
      %s146 = smul.addr %s145, 8
      %s147 = scalar_lea.vmem %s1, %s146
      %p148 = pneg %p72
      %p149 = pneg %p69
      %p150 = pneg %p100
      %p151 = pneg %p97
      %p152 = scmp.lt.s32.totalorder %s17, 1
      %s153 = scalar_select %p152, %s17, 1
      %p154 = scmp.lt.s32.totalorder %s18, 0
      %s155 = scalar_select %p154, %s18, 0
      %s156 = sadd.s32 %s155, %s153
      %s157 = smul.addr %s156, 8
      %s158 = scalar_lea.vmem %s2, %s157
      %p159 = scmp.lt.s32.totalorder %s18, 0
      %s160 = scalar_select %p159, %s18, 0
      %s161 = scalar_lea.vmem %s0, %s160
      %p162 = scmp.lt.s32.totalorder %s17, 1
      %s163 = scalar_select %p162, %s17, 1
      %s164 = smul.addr %s163, 8
      %s165 = scalar_lea.vmem %s1, %s164
      %p166 = scmp.lt.s32.totalorder %s17, 1
      %s167 = scalar_select %p166, %s17, 1
      %p168 = scmp.lt.s32.totalorder %s18, 0
      %s169 = scalar_select %p168, %s18, 0
      %s170 = sadd.s32 %s169, %s167
      %s171 = smul.addr %s170, 8
      %s172 = scalar_lea.vmem %s2, %s171
      %v173 = vld [vmem:[%s165] sm:$0xff]
      %v174 = vld [vmem:[%s161] sm:$0x1]
      %v176 = vlaneseq
      %v177 = vshrl.u32 %v176, 7
      %v178 = vsub.s32 0, %v177
      %v179 = vrot.slane %v174, %v178
      %v181 = vadd.f32 %v173, %v179
      %182 = vst [vmem:[%s172] sm:$0xff] %v181
      %p183 = scmp.lt.s32.totalorder %s17, 1
      %s184 = scalar_select %p183, %s17, 1
      %p185 = scmp.lt.s32.totalorder %s18, 0
      %s186 = scalar_select %p185, %s18, 0
      %s187 = sadd.s32 %s186, %s184
      %s188 = smul.addr %s187, 8
      %s189 = scalar_lea.vmem %s2, %s188
      // Predicated region
      $region29: #{qmix_forward.3} parent=27 // pred_check
        %p190 = pneg %p97
      $region30: #{qmix_forward.3} parent=27 // pred_check_branch
        %192 = sbr.rel (%p190) target = $region32
      $region31: #{qmix_forward.3} parent=27 // pred_region
        _
      $region32: #{qmix_forward.3} parent=27 // pred_fallthru
        _
    $region28: #{qmix_forward.3} parent=5 // pred_fallthru
      _
    %p193 = scmp.le.s32.totalorder 2, %s8
    // Predicated region
    $region33: #{qmix_forward.3} parent=5 // pred_check
      %p194 = pneg %p193
    $region34: #{qmix_forward.3} parent=5 // pred_check_branch
      %196 = sbr.rel (%p194) target = $region36
    $region35: #{qmix_forward.3} parent=5 // pred_region
      %s197 = ssub.s32 %s8, 2
      // Predicated region
      $region37: #{qmix_forward.3} parent=35 // pred_check
        %p198 = pneg %p103
      $region38: #{qmix_forward.3} parent=35 // pred_check_branch
        %200 = sbr.rel (%p198) target = $region40
      $region39: #{qmix_forward.3} parent=35 // pred_region
        %p201 = scmp.lt.s32.totalorder %s19, 1
        %s202 = scalar_select %p201, %s19, 1
        %p203 = scmp.lt.s32.totalorder %s20, 0
        %s204 = scalar_select %p203, %s20, 0
        %s205 = sadd.s32 %s204, %s202
        %s206 = smul.addr %s205, 8
        %s207 = scalar_lea.vmem %s2, %s206
      $region40: #{qmix_forward.3} parent=35 // pred_fallthru
        _
    $region36: #{qmix_forward.3} parent=5 // pred_fallthru
      _
  $region6: #{qmix_forward.3} parent=0 // loop_footer
    %s12 = sadd.s32 1, %s8
  $region7: #{qmix_forward.3} parent=0 // loop_footer_branch
    %7 = sbr.rel target = $region3
  $region8: #{qmix_forward.3} parent=0 // loop_exit
    _

</llo_original>
